<compile_context>
chip_gen: v7x
topology: tpu7x:2x2x1
jax: 0.10.0
libtpu: 0.0.40
codegen_flags: <defaults>
</compile_context>

<pallas_src>
import jax
import jax.numpy as jnp
import numpy as np
from jax import lax
from jax.experimental import pallas as pl
from jax.experimental.pallas import tpu as pltpu


def _round_up(x, m):
    return ((x + m - 1) // m) * m


# --------------------------------------------------------------------------
# Pallas kernel: one (b_tile, n_tile) score tile per grid point.
#   scores = q @ cand^T   with q: (b_tile, 2R), cand: (n_tile, 2R)
# Contract dim 1 of both operands (transposed-B matmul, native on the MXU);
# f32 accumulation regardless of input dtype.
# --------------------------------------------------------------------------
def tnt_score_kernel(q_ref, cand_ref, scores_ref):
    scores_ref[...] = lax.dot_general(
        q_ref[...], cand_ref[...],
        (((1,), (1,)), ((), ())),
        preferred_element_type=jnp.float32,
    ).astype(scores_ref.dtype)


def _vmem_capacity_bytes():
    try:
        info = pltpu.get_tpu_info()
        cap = getattr(info, "vmem_capacity_bytes", None)
        if cap:
            return int(cap)
    except Exception:
        pass
    return 64 * 2 ** 20  # conservative (v7x per-TC) fallback


def tnt_forward(x, emb_ent, emb_rel, emb_time, rank,
                time_granularity=1, no_time_emb=False,
                entity_tile=2048, batch_tile=256,
                compute_dtype=jnp.bfloat16):
    """Mirrors TNT.forward(x). Returns (scores, (nl, nr, nrhs), time_emb_out)."""
    N, width = emb_ent.shape
    assert width == 4 * rank, "entity embedding width must be 4*rank"
    B = x.shape[0]

    # --- glue: embedding lookups + quarter slicing (plain JAX) ---
    lhs = emb_ent[x[:, 0]]
    rel = emb_rel[x[:, 1]]
    rhs = emb_ent[x[:, 2]]
    time = emb_time[x[:, 3] // time_granularity]

    lhs0, lhs1 = lhs[:, :rank], lhs[:, 3 * rank:]
    rel0, rel1 = rel[:, :rank], rel[:, 3 * rank:]
    rhs0, rhs1 = rhs[:, :rank], rhs[:, 3 * rank:]
    t0, t1 = time[:, :rank], time[:, 3 * rank:]

    # --- hoisted prologue: trivial (B, rank) elementwise work in f32.
    # Keeping it outside the kernel removes any scratch-carried dependency so
    # both grid axes of the scoring matmul can be 'parallel'.
    fr0 = rel0 * t0 - rel1 * t1
    fr1 = rel1 * t0 + rel0 * t1
    qre = lhs0 * fr0 - lhs1 * fr1
    qim = lhs1 * fr0 + lhs0 * fr1
    nl = jnp.sqrt(lhs0 * lhs0 + lhs1 * lhs1)
    nr = jnp.sqrt(fr0 * fr0 + fr1 * fr1)
    nrh = jnp.sqrt(rhs0 * rhs0 + rhs1 * rhs1)

    # Query slab (B, 2R) and contiguous scoring table (N, 2R) = [re || im].
    # In a real ranking loop the scoring table is built once and reused across
    # forward calls; here it is rebuilt per call.
    q = jnp.concatenate([qre, qim], axis=1).astype(compute_dtype)
    cand = jnp.concatenate(
        [emb_ent[:, :rank], emb_ent[:, 3 * rank:]], axis=1).astype(compute_dtype)

    # --- tiling ---
    K = 2 * rank
    b_tile = int(min(batch_tile, _round_up(B, 8)))
    b_pad = _round_up(B, b_tile)
    n_tile = int(min(_round_up(entity_tile, 128), _round_up(N, 128)))
    n_pad = _round_up(N, n_tile)

    if b_pad != B:
        q = jnp.pad(q, ((0, b_pad - B), (0, 0)))
    if n_pad != N:
        cand = jnp.pad(cand, ((0, n_pad - N), (0, 0)))

    grid = (b_pad // b_tile, n_pad // n_tile)  # entity axis innermost

    in_bytes = jnp.dtype(compute_dtype).itemsize
    # Double-buffered input/output blocks (no scratch in the kernel).
    vmem_est = (2 * b_tile * K * in_bytes
                + 2 * n_tile * K * in_bytes
                + 2 * b_tile * n_tile * 4)
    vmem_cap = _vmem_capacity_bytes()
    vmem_limit = int(min(max(2 * vmem_est, 32 * 2 ** 20),
                         int(0.85 * vmem_cap)))

    cost = pl.CostEstimate(
        flops=int(2 * b_pad * n_pad * K),
        transcendentals=0,
        bytes_accessed=int(grid[0] * n_pad * K * in_bytes     # cand re-streamed per batch tile
                           + grid[1] * b_pad * K * in_bytes   # q re-streamed per entity tile
                           + b_pad * n_pad * 4),              # scores writeback
    )

    scores = pl.pallas_call(
        tnt_score_kernel,
        out_shape=jax.ShapeDtypeStruct((b_pad, n_pad), jnp.float32),
        grid=grid,
        in_specs=[pl.BlockSpec((b_tile, K), lambda b, n: (b, 0)),
                  pl.BlockSpec((n_tile, K), lambda b, n: (n, 0))],
        out_specs=pl.BlockSpec((b_tile, n_tile), lambda b, n: (b, n)),
        compiler_params=pltpu.CompilerParams(
            dimension_semantics=("parallel", "parallel"),
            vmem_limit_bytes=vmem_limit),
        cost_estimate=cost,
    )(q, cand)

    scores = scores[:B, :N]

    # --- glue: third output (time embedding slab) ---
    if no_time_emb:
        time_out = emb_time[:-1]
    else:
        time_out = jnp.concatenate(
            (emb_time[:, :rank], emb_time[:, 3 * rank:]), axis=1)

    return scores, (nl, nr, nrh), time_out


def tnt_forward_ref(x, emb_ent, emb_rel, emb_time, rank,
                    time_granularity=1, no_time_emb=False,
                    score_dtype=jnp.float32):
    """Pure-JAX reference matching the PyTorch forward.

    score_dtype lets us build a bf16-consistent reference (query/candidate
    rounded to bf16, products/accumulation in f32) to check the MXU path
    tightly while still comparing against the exact f32 math loosely.
    """
    lhs = emb_ent[x[:, 0]]
    rel = emb_rel[x[:, 1]]
    rhs = emb_ent[x[:, 2]]
    time = emb_time[x[:, 3] // time_granularity]
    lhs = (lhs[:, :rank], lhs[:, 3 * rank:])
    rel = (rel[:, :rank], rel[:, 3 * rank:])
    rhs = (rhs[:, :rank], rhs[:, 3 * rank:])
    time = (time[:, :rank], time[:, 3 * rank:])
    to_score = (emb_ent[:, :rank], emb_ent[:, 3 * rank:])
    rt = (rel[0] * time[0], rel[1] * time[0], rel[0] * time[1], rel[1] * time[1])
    full_rel = (rt[0] - rt[3], rt[1] + rt[2])
    q0 = lhs[0] * full_rel[0] - lhs[1] * full_rel[1]
    q1 = lhs[1] * full_rel[0] + lhs[0] * full_rel[1]
    q = jnp.concatenate([q0, q1], axis=1).astype(score_dtype).astype(jnp.float32)
    c = jnp.concatenate([to_score[0], to_score[1]],
                        axis=1).astype(score_dtype).astype(jnp.float32)
    scores = q @ c.T
    norms = (jnp.sqrt(lhs[0] ** 2 + lhs[1] ** 2),
             jnp.sqrt(full_rel[0] ** 2 + full_rel[1] ** 2),
             jnp.sqrt(rhs[0] ** 2 + rhs[1] ** 2))
    time_out = (emb_time[:-1] if no_time_emb else
                jnp.concatenate((emb_time[:, :rank], emb_time[:, 3 * rank:]), axis=1))
    return scores, norms, time_out


def init_tnt_params(key, sizes, rank, init_size=0.01, pre_train=True):
    """Deterministic init mimicking TNT.__init__ (N(0,1)*init_size, zero middle half)."""
    k0, k1, k2 = jax.random.split(key, 3)
    emb_ent = jax.random.normal(k0, (sizes[0], 4 * rank), jnp.float32) * init_size
    emb_rel = jax.random.normal(k1, (sizes[1], 4 * rank), jnp.float32) * init_size
    emb_time = jax.random.normal(k2, (sizes[3], 4 * rank), jnp.float32) * init_size
    if pre_train:
        emb_ent = emb_ent.at[:, rank:3 * rank].set(0.0)
        emb_rel = emb_rel.at[:, rank:3 * rank].set(0.0)
        emb_time = emb_time.at[:, rank:3 * rank].set(0.0)
    # self.W (4*rank, 1) is zeroed in __init__ and unused in forward().
    return emb_ent, emb_rel, emb_time


if __name__ == "__main__":
    # sizes = (n_entities, n_relations, n_entities, n_timestamps)
    sizes = (1024, 16, 1024, 32)
    rank = 128
    batch = 16
    time_granularity = 1

    key = jax.random.PRNGKey(0)
    pkey, ikey = jax.random.split(key)
    emb_ent, emb_rel, emb_time = init_tnt_params(pkey, sizes, rank)

    k_lhs, k_rel, k_rhs, k_t = jax.random.split(ikey, 4)
    x = jnp.stack([
        jax.random.randint(k_lhs, (batch,), 0, sizes[0]),
        jax.random.randint(k_rel, (batch,), 0, sizes[1]),
        jax.random.randint(k_rhs, (batch,), 0, sizes[2]),
        jax.random.randint(k_t, (batch,), 0, sizes[3]),
    ], axis=1).astype(jnp.int32)

    scores, (nl, nr, nrh), time_out = tnt_forward(
        x, emb_ent, emb_rel, emb_time, rank, time_granularity)
    jax.block_until_ready((scores, nl, nr, nrh, time_out))

    # Tight check against a bf16-consistent reference (same operand rounding,
    # f32 accumulation), plus a loose check against the exact f32 math.
    r_scores_bf, _, _ = tnt_forward_ref(
        x, emb_ent, emb_rel, emb_time, rank, time_granularity,
        score_dtype=jnp.bfloat16)
    r_scores_f32, (rnl, rnr, rnrh), r_time = tnt_forward_ref(
        x, emb_ent, emb_rel, emb_time, rank, time_granularity,
        score_dtype=jnp.float32)

    np.testing.assert_allclose(np.asarray(scores), np.asarray(r_scores_bf),
                               rtol=1e-4, atol=1e-10)
    np.testing.assert_allclose(np.asarray(scores), np.asarray(r_scores_f32),
                               rtol=2e-2, atol=1e-7)
    np.testing.assert_allclose(np.asarray(nl), np.asarray(rnl), rtol=1e-5, atol=1e-7)
    np.testing.assert_allclose(np.asarray(nr), np.asarray(rnr), rtol=1e-5, atol=1e-7)
    np.testing.assert_allclose(np.asarray(nrh), np.asarray(rnrh), rtol=1e-5, atol=1e-7)
    np.testing.assert_allclose(np.asarray(time_out), np.asarray(r_time),
                               rtol=1e-5, atol=1e-7)

    print("KERNEL_OK")
</pallas_src>

<mosaic_0001>
module attributes {stable_mosaic.version = 11 : i64} {
  func.func @tnt_score_kernel(%arg0: i32, %arg1: i32, %arg2: memref<16x256xbf16, #tpu.memory_space<vmem>>, %arg3: memref<1024x256xbf16, #tpu.memory_space<vmem>>, %arg4: memref<16x1024xf32, #tpu.memory_space<vmem>>) attributes {dimension_semantics = [#tpu.dimension_semantics<parallel>, #tpu.dimension_semantics<parallel>], iteration_bounds = array<i64: 1, 1>, scalar_prefetch = 0 : i64, scratch_operands = 0 : i64, tpu.core_type = #tpu.core_type<tc>, window_params = [{transform_indices = @transform_0, window_bounds = array<i64: 16, 256>}, {transform_indices = @transform_1, window_bounds = array<i64: 1024, 256>}, {transform_indices = @transform_2, window_bounds = array<i64: 16, 1024>}]} {
    %c0 = arith.constant 0 : index
    %c0_0 = arith.constant 0 : index
    %0 = vector.load %arg2[%c0, %c0_0] : memref<16x256xbf16, #tpu.memory_space<vmem>>, vector<16x256xbf16>
    %c0_1 = arith.constant 0 : index
    %c0_2 = arith.constant 0 : index
    %1 = vector.load %arg3[%c0_1, %c0_2] : memref<1024x256xbf16, #tpu.memory_space<vmem>>, vector<1024x256xbf16>
    %cst = arith.constant dense<0.000000e+00> : vector<16x1024xf32>
    %2 = tpu.matmul %0, %1, %cst {dimension_numbers = #tpu.dot_dimension_numbers<[1], [1], [0], [0], [0, 0, 1, 0], [], []>} : vector<16x256xbf16>, vector<1024x256xbf16>, vector<16x1024xf32> -> vector<16x1024xf32>
    %c0_3 = arith.constant 0 : index
    %c0_4 = arith.constant 0 : index
    %3 = vector.load %arg4[%c0_3, %c0_4] : memref<16x1024xf32, #tpu.memory_space<vmem>>, vector<16x1024xf32>
    tpu.vector_store %arg4[%c0_3, %c0_4], %2 {strides = array<i32>} : memref<16x1024xf32, #tpu.memory_space<vmem>>, vector<16x1024xf32>,
    return
  }
  func.func @transform_0(%arg0: i32, %arg1: i32) -> (i32, i32) {
    %c0_i32 = arith.constant 0 : i32
    %c0_i32_0 = arith.constant 0 : i32
    return %arg0, %c0_i32 : i32, i32
  }
  func.func @transform_1(%arg0: i32, %arg1: i32) -> (i32, i32) {
    %c0_i32 = arith.constant 0 : i32
    %c0_i32_0 = arith.constant 0 : i32
    return %arg1, %c0_i32 : i32, i32
  }
  func.func @transform_2(%arg0: i32, %arg1: i32) -> (i32, i32) {
    %c0_i32 = arith.constant 0 : i32
    return %arg0, %arg1 : i32, i32
  }
}

</mosaic_0001>

<llo_original>
// kernel: tpu_custom_call.1
$region0: #{tpu_custom_call.1}
  #allocation0 [shape = 'u32[]', space=smem, size = 0x4, offset = 0x4, fixed_abs, tag = 'smem constant byte address 0x4 - core index']
  #allocation1 [shape = 'u32[144,128]{1,0:T(1,128)}', space=vmem, size = 0x12000, scoped, tag = 'internal scratch']
  %s0 = inlined_call_operand.hbm [shape: bf16[16,256], index: 0, kind: input, shape index: {}]
  %s1 = inlined_call_operand.hbm [shape: bf16[1024,256], index: 1, kind: input, shape index: {}]
  %s2 = inlined_call_operand.hbm [shape: f32[16,1024], index: 2, kind: output, shape index: {}]
  %s3 = sld [smem:[#allocation0]]
  $region26: #{tpu_custom_call.1} parent=0
    _
  %s5 = ssub.s32 1, %s3
  %s6 = scalar_select 0, %s5, %s3
  $region1: #{tpu_custom_call.1} parent=0
    #allocation2 [shape = 'u8[8192]{0}', space=vmem, size = 0x2000, scoped, tag = 'input window, operand 0, single buffered']
    #allocation3 [shape = 's32[1]{0}', space=sflag, size = 0x4, scoped, tag = 'scoped memory for tpu_custom_call.1']
    #allocation4 [shape = 's32[1]{0}', space=sflag, size = 0x4, scoped, tag = 'scoped memory for tpu_custom_call.1']
    #allocation5 [shape = 'u8[524288]{0}', space=vmem, size = 0x80000, scoped, tag = 'input window, operand 1, single buffered']
    #allocation6 [shape = 's32[1]{0}', space=sflag, size = 0x4, scoped, tag = 'scoped memory for tpu_custom_call.1']
    #allocation7 [shape = 'u8[65536]{0}', space=vmem, size = 0x10000, scoped, tag = 'output window, operand 0, single buffered']
    %7 = vsyncpa [#allocation3], 0
    %8 = vsyncpa [#allocation6], 0
    %9 = vsyncpa [#allocation4], 0
    // Predicated region
    $region2: #{tpu_custom_call.1} parent=1 // pred_check
      _
    $region3: #{tpu_custom_call.1} parent=1 // pred_check_branch
      %11 = sbr.rel (0) target = $region5
    $region4: #{tpu_custom_call.1} parent=1 // pred_region
      %s13 = ssub.s32 256, 256
      %14 = vsyncadd [#allocation3], %s13
      %s15 = sshll.u32 [#allocation2], 4
      %s16 = int_to_ptr.vmem [resolvable:$true] %s15
      %21 = dma.hbm_to_vmem [thread:$0]  %s0, 256, %s16, [#allocation3], 128, 128, 8
    $region5: #{tpu_custom_call.1} parent=1 // pred_fallthru
      _
    // Predicated region
    $region6: #{tpu_custom_call.1} parent=1 // pred_check
      _
    $region7: #{tpu_custom_call.1} parent=1 // pred_check_branch
      %23 = sbr.rel (0) target = $region9
    $region8: #{tpu_custom_call.1} parent=1 // pred_region
      %s25 = ssub.s32 16384, 16384
      %26 = vsyncadd [#allocation6], %s25
      %s27 = sshll.u32 [#allocation5], 4
      %s28 = int_to_ptr.vmem [resolvable:$true] %s27
      %33 = dma.hbm_to_vmem [thread:$0]  %s1, 16384, %s28, [#allocation6], 128, 128, 8
    $region9: #{tpu_custom_call.1} parent=1 // pred_fallthru
      _
    // Predicated region
    $region10: #{tpu_custom_call.1} parent=1 // pred_check
      _
    $region11: #{tpu_custom_call.1} parent=1 // pred_check_branch
      %35 = sbr.rel (0) target = $region13
    $region12: #{tpu_custom_call.1} parent=1 // pred_region
      %36 = dma.done [#allocation3], 256
    $region13: #{tpu_custom_call.1} parent=1 // pred_fallthru
      _
    // Predicated region
    $region14: #{tpu_custom_call.1} parent=1 // pred_check
      _
    $region15: #{tpu_custom_call.1} parent=1 // pred_check_branch
      %38 = sbr.rel (0) target = $region17
    $region16: #{tpu_custom_call.1} parent=1 // pred_region
      %39 = dma.done [#allocation6], 16384
    $region17: #{tpu_custom_call.1} parent=1 // pred_fallthru
      _
    %v40 = vld [vmem:[#allocation2] sm:$0xff]
    %v41 = vld [vmem:[#allocation2 + $0x8] sm:$0xff]
    %v42 = vld [vmem:[#allocation5] sm:$0xff]
    %v43 = vld [vmem:[#allocation5 + $0x8] sm:$0xff]
    %v44 = vld [vmem:[#allocation5 + $0x10] sm:$0xff]
    %v45 = vld [vmem:[#allocation5 + $0x18] sm:$0xff]
    %v46 = vld [vmem:[#allocation5 + $0x20] sm:$0xff]
    %v47 = vld [vmem:[#allocation5 + $0x28] sm:$0xff]
    %v48 = vld [vmem:[#allocation5 + $0x30] sm:$0xff]
    %v49 = vld [vmem:[#allocation5 + $0x38] sm:$0xff]
    %v50 = vld [vmem:[#allocation5 + $0x40] sm:$0xff]
    %v51 = vld [vmem:[#allocation5 + $0x48] sm:$0xff]
    %v52 = vld [vmem:[#allocation5 + $0x50] sm:$0xff]
    %v53 = vld [vmem:[#allocation5 + $0x58] sm:$0xff]
    %v54 = vld [vmem:[#allocation5 + $0x60] sm:$0xff]
    %v55 = vld [vmem:[#allocation5 + $0x68] sm:$0xff]
    %v56 = vld [vmem:[#allocation5 + $0x70] sm:$0xff]
    %v57 = vld [vmem:[#allocation5 + $0x78] sm:$0xff]
    %v58 = vld [vmem:[#allocation5 + $0x80] sm:$0xff]
    %v59 = vld [vmem:[#allocation5 + $0x88] sm:$0xff]
    %v60 = vld [vmem:[#allocation5 + $0x90] sm:$0xff]
    %v61 = vld [vmem:[#allocation5 + $0x98] sm:$0xff]
    %v62 = vld [vmem:[#allocation5 + $0xa0] sm:$0xff]
    %v63 = vld [vmem:[#allocation5 + $0xa8] sm:$0xff]
    %v64 = vld [vmem:[#allocation5 + $0xb0] sm:$0xff]
    %v65 = vld [vmem:[#allocation5 + $0xb8] sm:$0xff]
    %v66 = vld [vmem:[#allocation5 + $0xc0] sm:$0xff]
    %v67 = vld [vmem:[#allocation5 + $0xc8] sm:$0xff]
    %v68 = vld [vmem:[#allocation5 + $0xd0] sm:$0xff]
    %v69 = vld [vmem:[#allocation5 + $0xd8] sm:$0xff]
    %v70 = vld [vmem:[#allocation5 + $0xe0] sm:$0xff]
    %v71 = vld [vmem:[#allocation5 + $0xe8] sm:$0xff]
    %v72 = vld [vmem:[#allocation5 + $0xf0] sm:$0xff]
    %v73 = vld [vmem:[#allocation5 + $0xf8] sm:$0xff]
    %v74 = vld [vmem:[#allocation5 + $0x100] sm:$0xff]
    %v75 = vld [vmem:[#allocation5 + $0x108] sm:$0xff]
    %v76 = vld [vmem:[#allocation5 + $0x110] sm:$0xff]
    %v77 = vld [vmem:[#allocation5 + $0x118] sm:$0xff]
    %v78 = vld [vmem:[#allocation5 + $0x120] sm:$0xff]
    %v79 = vld [vmem:[#allocation5 + $0x128] sm:$0xff]
    %v80 = vld [vmem:[#allocation5 + $0x130] sm:$0xff]
    %v81 = vld [vmem:[#allocation5 + $0x138] sm:$0xff]
    %v82 = vld [vmem:[#allocation5 + $0x140] sm:$0xff]
    %v83 = vld [vmem:[#allocation5 + $0x148] sm:$0xff]
    %v84 = vld [vmem:[#allocation5 + $0x150] sm:$0xff]
    %v85 = vld [vmem:[#allocation5 + $0x158] sm:$0xff]
    %v86 = vld [vmem:[#allocation5 + $0x160] sm:$0xff]
    %v87 = vld [vmem:[#allocation5 + $0x168] sm:$0xff]
    %v88 = vld [vmem:[#allocation5 + $0x170] sm:$0xff]
    %v89 = vld [vmem:[#allocation5 + $0x178] sm:$0xff]
    %v90 = vld [vmem:[#allocation5 + $0x180] sm:$0xff]
    %v91 = vld [vmem:[#allocation5 + $0x188] sm:$0xff]
    %v92 = vld [vmem:[#allocation5 + $0x190] sm:$0xff]
    %v93 = vld [vmem:[#allocation5 + $0x198] sm:$0xff]
    %v94 = vld [vmem:[#allocation5 + $0x1a0] sm:$0xff]
    %v95 = vld [vmem:[#allocation5 + $0x1a8] sm:$0xff]
    %v96 = vld [vmem:[#allocation5 + $0x1b0] sm:$0xff]
    %v97 = vld [vmem:[#allocation5 + $0x1b8] sm:$0xff]
    %v98 = vld [vmem:[#allocation5 + $0x1c0] sm:$0xff]
    %v99 = vld [vmem:[#allocation5 + $0x1c8] sm:$0xff]
    %v100 = vld [vmem:[#allocation5 + $0x1d0] sm:$0xff]
    %v101 = vld [vmem:[#allocation5 + $0x1d8] sm:$0xff]
    %v102 = vld [vmem:[#allocation5 + $0x1e0] sm:$0xff]
    %v103 = vld [vmem:[#allocation5 + $0x1e8] sm:$0xff]
    %v104 = vld [vmem:[#allocation5 + $0x1f0] sm:$0xff]
    %v105 = vld [vmem:[#allocation5 + $0x1f8] sm:$0xff]
    %v106 = vld [vmem:[#allocation5 + $0x200] sm:$0xff]
    %v107 = vld [vmem:[#allocation5 + $0x208] sm:$0xff]
    %v108 = vld [vmem:[#allocation5 + $0x210] sm:$0xff]
    %v109 = vld [vmem:[#allocation5 + $0x218] sm:$0xff]
    %v110 = vld [vmem:[#allocation5 + $0x220] sm:$0xff]
    %v111 = vld [vmem:[#allocation5 + $0x228] sm:$0xff]
    %v112 = vld [vmem:[#allocation5 + $0x230] sm:$0xff]
    %v113 = vld [vmem:[#allocation5 + $0x238] sm:$0xff]
    %v114 = vld [vmem:[#allocation5 + $0x240] sm:$0xff]
    %v115 = vld [vmem:[#allocation5 + $0x248] sm:$0xff]
    %v116 = vld [vmem:[#allocation5 + $0x250] sm:$0xff]
    %v117 = vld [vmem:[#allocation5 + $0x258] sm:$0xff]
    %v118 = vld [vmem:[#allocation5 + $0x260] sm:$0xff]
    %v119 = vld [vmem:[#allocation5 + $0x268] sm:$0xff]
    %v120 = vld [vmem:[#allocation5 + $0x270] sm:$0xff]
    %v121 = vld [vmem:[#allocation5 + $0x278] sm:$0xff]
    %v122 = vld [vmem:[#allocation5 + $0x280] sm:$0xff]
    %v123 = vld [vmem:[#allocation5 + $0x288] sm:$0xff]
    %v124 = vld [vmem:[#allocation5 + $0x290] sm:$0xff]
    %v125 = vld [vmem:[#allocation5 + $0x298] sm:$0xff]
    %v126 = vld [vmem:[#allocation5 + $0x2a0] sm:$0xff]
    %v127 = vld [vmem:[#allocation5 + $0x2a8] sm:$0xff]
    %v128 = vld [vmem:[#allocation5 + $0x2b0] sm:$0xff]
    %v129 = vld [vmem:[#allocation5 + $0x2b8] sm:$0xff]
    %v130 = vld [vmem:[#allocation5 + $0x2c0] sm:$0xff]
    %v131 = vld [vmem:[#allocation5 + $0x2c8] sm:$0xff]
    %v132 = vld [vmem:[#allocation5 + $0x2d0] sm:$0xff]
    %v133 = vld [vmem:[#allocation5 + $0x2d8] sm:$0xff]
    %v134 = vld [vmem:[#allocation5 + $0x2e0] sm:$0xff]
    %v135 = vld [vmem:[#allocation5 + $0x2e8] sm:$0xff]
    %v136 = vld [vmem:[#allocation5 + $0x2f0] sm:$0xff]
    %v137 = vld [vmem:[#allocation5 + $0x2f8] sm:$0xff]
    %v138 = vld [vmem:[#allocation5 + $0x300] sm:$0xff]
    %v139 = vld [vmem:[#allocation5 + $0x308] sm:$0xff]
    %v140 = vld [vmem:[#allocation5 + $0x310] sm:$0xff]
    %v141 = vld [vmem:[#allocation5 + $0x318] sm:$0xff]
    %v142 = vld [vmem:[#allocation5 + $0x320] sm:$0xff]
    %v143 = vld [vmem:[#allocation5 + $0x328] sm:$0xff]
    %v144 = vld [vmem:[#allocation5 + $0x330] sm:$0xff]
    %v145 = vld [vmem:[#allocation5 + $0x338] sm:$0xff]
    %v146 = vld [vmem:[#allocation5 + $0x340] sm:$0xff]
    %v147 = vld [vmem:[#allocation5 + $0x348] sm:$0xff]
    %v148 = vld [vmem:[#allocation5 + $0x350] sm:$0xff]
    %v149 = vld [vmem:[#allocation5 + $0x358] sm:$0xff]
    %v150 = vld [vmem:[#allocation5 + $0x360] sm:$0xff]
    %v151 = vld [vmem:[#allocation5 + $0x368] sm:$0xff]
    %v152 = vld [vmem:[#allocation5 + $0x370] sm:$0xff]
    %v153 = vld [vmem:[#allocation5 + $0x378] sm:$0xff]
    %v154 = vld [vmem:[#allocation5 + $0x380] sm:$0xff]
    %v155 = vld [vmem:[#allocation5 + $0x388] sm:$0xff]
    %v156 = vld [vmem:[#allocation5 + $0x390] sm:$0xff]
    %v157 = vld [vmem:[#allocation5 + $0x398] sm:$0xff]
    %v158 = vld [vmem:[#allocation5 + $0x3a0] sm:$0xff]
    %v159 = vld [vmem:[#allocation5 + $0x3a8] sm:$0xff]
    %v160 = vld [vmem:[#allocation5 + $0x3b0] sm:$0xff]
    %v161 = vld [vmem:[#allocation5 + $0x3b8] sm:$0xff]
    %v162 = vld [vmem:[#allocation5 + $0x3c0] sm:$0xff]
    %v163 = vld [vmem:[#allocation5 + $0x3c8] sm:$0xff]
    %v164 = vld [vmem:[#allocation5 + $0x3d0] sm:$0xff]
    %v165 = vld [vmem:[#allocation5 + $0x3d8] sm:$0xff]
    %v166 = vld [vmem:[#allocation5 + $0x3e0] sm:$0xff]
    %v167 = vld [vmem:[#allocation5 + $0x3e8] sm:$0xff]
    %v168 = vld [vmem:[#allocation5 + $0x3f0] sm:$0xff]
    %v169 = vld [vmem:[#allocation5 + $0x3f8] sm:$0xff]
    %v172 = vunpack.c.l.b16 %v40
    %v173 = vunpack.c.h.b16 %v40
    %v174 = vunpack.c.l.b16 %v41
    %v175 = vunpack.c.h.b16 %v41
    %v176 = vpack.c.b16 %v174, %v172
    %v177 = vpack.c.b16 %v175, %v173
    %v308 = vunpack.c.l.b16 %v42
    %v309 = vunpack.c.h.b16 %v42
    %v310 = vunpack.c.l.b16 %v43
    %v311 = vunpack.c.h.b16 %v43
    %v312 = vunpack.c.l.b16 %v44
    %v313 = vunpack.c.h.b16 %v44
    %v314 = vunpack.c.l.b16 %v45
    %v315 = vunpack.c.h.b16 %v45
    %v316 = vunpack.c.l.b16 %v46
    %v317 = vunpack.c.h.b16 %v46
    %v318 = vunpack.c.l.b16 %v47
    %v319 = vunpack.c.h.b16 %v47
    %v320 = vunpack.c.l.b16 %v48
    %v321 = vunpack.c.h.b16 %v48
    %v322 = vunpack.c.l.b16 %v49
    %v323 = vunpack.c.h.b16 %v49
    %v324 = vunpack.c.l.b16 %v50
    %v325 = vunpack.c.h.b16 %v50
    %v326 = vunpack.c.l.b16 %v51
    %v327 = vunpack.c.h.b16 %v51
    %v328 = vunpack.c.l.b16 %v52
    %v329 = vunpack.c.h.b16 %v52
    %v330 = vunpack.c.l.b16 %v53
    %v331 = vunpack.c.h.b16 %v53
    %v332 = vunpack.c.l.b16 %v54
    %v333 = vunpack.c.h.b16 %v54
    %v334 = vunpack.c.l.b16 %v55
    %v335 = vunpack.c.h.b16 %v55
    %v336 = vunpack.c.l.b16 %v56
    %v337 = vunpack.c.h.b16 %v56
    %v338 = vunpack.c.l.b16 %v57
    %v339 = vunpack.c.h.b16 %v57
    %v340 = vunpack.c.l.b16 %v58
    %v341 = vunpack.c.h.b16 %v58
    %v342 = vunpack.c.l.b16 %v59
    %v343 = vunpack.c.h.b16 %v59
    %v344 = vunpack.c.l.b16 %v60
    %v345 = vunpack.c.h.b16 %v60
    %v346 = vunpack.c.l.b16 %v61
    %v347 = vunpack.c.h.b16 %v61
    %v348 = vunpack.c.l.b16 %v62
    %v349 = vunpack.c.h.b16 %v62
    %v350 = vunpack.c.l.b16 %v63
    %v351 = vunpack.c.h.b16 %v63
    %v352 = vunpack.c.l.b16 %v64
    %v353 = vunpack.c.h.b16 %v64
    %v354 = vunpack.c.l.b16 %v65
    %v355 = vunpack.c.h.b16 %v65
    %v356 = vunpack.c.l.b16 %v66
    %v357 = vunpack.c.h.b16 %v66
    %v358 = vunpack.c.l.b16 %v67
    %v359 = vunpack.c.h.b16 %v67
    %v360 = vunpack.c.l.b16 %v68
    %v361 = vunpack.c.h.b16 %v68
    %v362 = vunpack.c.l.b16 %v69
    %v363 = vunpack.c.h.b16 %v69
    %v364 = vunpack.c.l.b16 %v70
    %v365 = vunpack.c.h.b16 %v70
    %v366 = vunpack.c.l.b16 %v71
    %v367 = vunpack.c.h.b16 %v71
    %v368 = vunpack.c.l.b16 %v72
    %v369 = vunpack.c.h.b16 %v72
    %v370 = vunpack.c.l.b16 %v73
    %v371 = vunpack.c.h.b16 %v73
    %v372 = vunpack.c.l.b16 %v74
    %v373 = vunpack.c.h.b16 %v74
    %v374 = vunpack.c.l.b16 %v75
    %v375 = vunpack.c.h.b16 %v75
    %v376 = vunpack.c.l.b16 %v76
    %v377 = vunpack.c.h.b16 %v76
    %v378 = vunpack.c.l.b16 %v77
    %v379 = vunpack.c.h.b16 %v77
    %v380 = vunpack.c.l.b16 %v78
    %v381 = vunpack.c.h.b16 %v78
    %v382 = vunpack.c.l.b16 %v79
    %v383 = vunpack.c.h.b16 %v79
    %v384 = vunpack.c.l.b16 %v80
    %v385 = vunpack.c.h.b16 %v80
    %v386 = vunpack.c.l.b16 %v81
    %v387 = vunpack.c.h.b16 %v81
    %v388 = vunpack.c.l.b16 %v82
    %v389 = vunpack.c.h.b16 %v82
    %v390 = vunpack.c.l.b16 %v83
    %v391 = vunpack.c.h.b16 %v83
    %v392 = vunpack.c.l.b16 %v84
    %v393 = vunpack.c.h.b16 %v84
    %v394 = vunpack.c.l.b16 %v85
    %v395 = vunpack.c.h.b16 %v85
    %v396 = vunpack.c.l.b16 %v86
    %v397 = vunpack.c.h.b16 %v86
    %v398 = vunpack.c.l.b16 %v87
    %v399 = vunpack.c.h.b16 %v87
    %v400 = vunpack.c.l.b16 %v88
    %v401 = vunpack.c.h.b16 %v88
    %v402 = vunpack.c.l.b16 %v89
    %v403 = vunpack.c.h.b16 %v89
    %v404 = vunpack.c.l.b16 %v90
    %v405 = vunpack.c.h.b16 %v90
    %v406 = vunpack.c.l.b16 %v91
    %v407 = vunpack.c.h.b16 %v91
    %v408 = vunpack.c.l.b16 %v92
    %v409 = vunpack.c.h.b16 %v92
    %v410 = vunpack.c.l.b16 %v93
    %v411 = vunpack.c.h.b16 %v93
    %v412 = vunpack.c.l.b16 %v94
    %v413 = vunpack.c.h.b16 %v94
    %v414 = vunpack.c.l.b16 %v95
    %v415 = vunpack.c.h.b16 %v95
    %v416 = vunpack.c.l.b16 %v96
    %v417 = vunpack.c.h.b16 %v96
    %v418 = vunpack.c.l.b16 %v97
    %v419 = vunpack.c.h.b16 %v97
    %v420 = vunpack.c.l.b16 %v98
    %v421 = vunpack.c.h.b16 %v98
    %v422 = vunpack.c.l.b16 %v99
    %v423 = vunpack.c.h.b16 %v99
    %v424 = vunpack.c.l.b16 %v100
    %v425 = vunpack.c.h.b16 %v100
    %v426 = vunpack.c.l.b16 %v101
    %v427 = vunpack.c.h.b16 %v101
    %v428 = vunpack.c.l.b16 %v102
    %v429 = vunpack.c.h.b16 %v102
    %v430 = vunpack.c.l.b16 %v103
    %v431 = vunpack.c.h.b16 %v103
    %v432 = vunpack.c.l.b16 %v104
    %v433 = vunpack.c.h.b16 %v104
    %v434 = vunpack.c.l.b16 %v105
    %v435 = vunpack.c.h.b16 %v105
    %v436 = vunpack.c.l.b16 %v106
    %v437 = vunpack.c.h.b16 %v106
    %v438 = vunpack.c.l.b16 %v107
    %v439 = vunpack.c.h.b16 %v107
    %v440 = vunpack.c.l.b16 %v108
    %v441 = vunpack.c.h.b16 %v108
    %v442 = vunpack.c.l.b16 %v109
    %v443 = vunpack.c.h.b16 %v109
    %v444 = vunpack.c.l.b16 %v110
    %v445 = vunpack.c.h.b16 %v110
    %v446 = vunpack.c.l.b16 %v111
    %v447 = vunpack.c.h.b16 %v111
    %v448 = vunpack.c.l.b16 %v112
    %v449 = vunpack.c.h.b16 %v112
    %v450 = vunpack.c.l.b16 %v113
    %v451 = vunpack.c.h.b16 %v113
    %v452 = vunpack.c.l.b16 %v114
    %v453 = vunpack.c.h.b16 %v114
    %v454 = vunpack.c.l.b16 %v115
    %v455 = vunpack.c.h.b16 %v115
    %v456 = vunpack.c.l.b16 %v116
    %v457 = vunpack.c.h.b16 %v116
    %v458 = vunpack.c.l.b16 %v117
    %v459 = vunpack.c.h.b16 %v117
    %v460 = vunpack.c.l.b16 %v118
    %v461 = vunpack.c.h.b16 %v118
    %v462 = vunpack.c.l.b16 %v119
    %v463 = vunpack.c.h.b16 %v119
    %v464 = vunpack.c.l.b16 %v120
    %v465 = vunpack.c.h.b16 %v120
    %v466 = vunpack.c.l.b16 %v121
    %v467 = vunpack.c.h.b16 %v121
    %v468 = vunpack.c.l.b16 %v122
    %v469 = vunpack.c.h.b16 %v122
    %v470 = vunpack.c.l.b16 %v123
    %v471 = vunpack.c.h.b16 %v123
    %v472 = vunpack.c.l.b16 %v124
    %v473 = vunpack.c.h.b16 %v124
    %v474 = vunpack.c.l.b16 %v125
    %v475 = vunpack.c.h.b16 %v125
    %v476 = vunpack.c.l.b16 %v126
    %v477 = vunpack.c.h.b16 %v126
    %v478 = vunpack.c.l.b16 %v127
    %v479 = vunpack.c.h.b16 %v127
    %v480 = vunpack.c.l.b16 %v128
    %v481 = vunpack.c.h.b16 %v128
    %v482 = vunpack.c.l.b16 %v129
    %v483 = vunpack.c.h.b16 %v129
    %v484 = vunpack.c.l.b16 %v130
    %v485 = vunpack.c.h.b16 %v130
    %v486 = vunpack.c.l.b16 %v131
    %v487 = vunpack.c.h.b16 %v131
    %v488 = vunpack.c.l.b16 %v132
    %v489 = vunpack.c.h.b16 %v132
    %v490 = vunpack.c.l.b16 %v133
    %v491 = vunpack.c.h.b16 %v133
    %v492 = vunpack.c.l.b16 %v134
    %v493 = vunpack.c.h.b16 %v134
    %v494 = vunpack.c.l.b16 %v135
    %v495 = vunpack.c.h.b16 %v135
    %v496 = vunpack.c.l.b16 %v136
    %v497 = vunpack.c.h.b16 %v136
    %v498 = vunpack.c.l.b16 %v137
    %v499 = vunpack.c.h.b16 %v137
    %v500 = vunpack.c.l.b16 %v138
    %v501 = vunpack.c.h.b16 %v138
    %v502 = vunpack.c.l.b16 %v139
    %v503 = vunpack.c.h.b16 %v139
    %v504 = vunpack.c.l.b16 %v140
    %v505 = vunpack.c.h.b16 %v140
    %v506 = vunpack.c.l.b16 %v141
    %v507 = vunpack.c.h.b16 %v141
    %v508 = vunpack.c.l.b16 %v142
    %v509 = vunpack.c.h.b16 %v142
    %v510 = vunpack.c.l.b16 %v143
    %v511 = vunpack.c.h.b16 %v143
    %v512 = vunpack.c.l.b16 %v144
    %v513 = vunpack.c.h.b16 %v144
    %v514 = vunpack.c.l.b16 %v145
    %v515 = vunpack.c.h.b16 %v145
    %v516 = vunpack.c.l.b16 %v146
    %v517 = vunpack.c.h.b16 %v146
    %v518 = vunpack.c.l.b16 %v147
    %v519 = vunpack.c.h.b16 %v147
    %v520 = vunpack.c.l.b16 %v148
    %v521 = vunpack.c.h.b16 %v148
    %v522 = vunpack.c.l.b16 %v149
    %v523 = vunpack.c.h.b16 %v149
    %v524 = vunpack.c.l.b16 %v150
    %v525 = vunpack.c.h.b16 %v150
    %v526 = vunpack.c.l.b16 %v151
    %v527 = vunpack.c.h.b16 %v151
    %v528 = vunpack.c.l.b16 %v152
    %v529 = vunpack.c.h.b16 %v152
    %v530 = vunpack.c.l.b16 %v153
    %v531 = vunpack.c.h.b16 %v153
    %v532 = vunpack.c.l.b16 %v154
    %v533 = vunpack.c.h.b16 %v154
    %v534 = vunpack.c.l.b16 %v155
    %v535 = vunpack.c.h.b16 %v155
    %v536 = vunpack.c.l.b16 %v156
    %v537 = vunpack.c.h.b16 %v156
    %v538 = vunpack.c.l.b16 %v157
    %v539 = vunpack.c.h.b16 %v157
    %v540 = vunpack.c.l.b16 %v158
    %v541 = vunpack.c.h.b16 %v158
    %v542 = vunpack.c.l.b16 %v159
    %v543 = vunpack.c.h.b16 %v159
    %v544 = vunpack.c.l.b16 %v160
    %v545 = vunpack.c.h.b16 %v160
    %v546 = vunpack.c.l.b16 %v161
    %v547 = vunpack.c.h.b16 %v161
    %v548 = vunpack.c.l.b16 %v162
    %v549 = vunpack.c.h.b16 %v162
    %v550 = vunpack.c.l.b16 %v163
    %v551 = vunpack.c.h.b16 %v163
    %v552 = vunpack.c.l.b16 %v164
    %v553 = vunpack.c.h.b16 %v164
    %v554 = vunpack.c.l.b16 %v165
    %v555 = vunpack.c.h.b16 %v165
    %v556 = vunpack.c.l.b16 %v166
    %v557 = vunpack.c.h.b16 %v166
    %v558 = vunpack.c.l.b16 %v167
    %v559 = vunpack.c.h.b16 %v167
    %v560 = vunpack.c.l.b16 %v168
    %v561 = vunpack.c.h.b16 %v168
    %v562 = vunpack.c.l.b16 %v169
    %v563 = vunpack.c.h.b16 %v169
    %v564 = vpack.c.b16 %v310, %v308
    %v565 = vpack.c.b16 %v311, %v309
    %v566 = vpack.c.b16 %v314, %v312
    %v567 = vpack.c.b16 %v315, %v313
    %v568 = vpack.c.b16 %v318, %v316
    %v569 = vpack.c.b16 %v319, %v317
    %v570 = vpack.c.b16 %v322, %v320
    %v571 = vpack.c.b16 %v323, %v321
    %v572 = vpack.c.b16 %v326, %v324
    %v573 = vpack.c.b16 %v327, %v325
    %v574 = vpack.c.b16 %v330, %v328
    %v575 = vpack.c.b16 %v331, %v329
    %v576 = vpack.c.b16 %v334, %v332
    %v577 = vpack.c.b16 %v335, %v333
    %v578 = vpack.c.b16 %v338, %v336
    %v579 = vpack.c.b16 %v339, %v337
    %v580 = vpack.c.b16 %v342, %v340
    %v581 = vpack.c.b16 %v343, %v341
    %v582 = vpack.c.b16 %v346, %v344
    %v583 = vpack.c.b16 %v347, %v345
    %v584 = vpack.c.b16 %v350, %v348
    %v585 = vpack.c.b16 %v351, %v349
    %v586 = vpack.c.b16 %v354, %v352
    %v587 = vpack.c.b16 %v355, %v353
    %v588 = vpack.c.b16 %v358, %v356
    %v589 = vpack.c.b16 %v359, %v357
    %v590 = vpack.c.b16 %v362, %v360
    %v591 = vpack.c.b16 %v363, %v361
    %v592 = vpack.c.b16 %v366, %v364
    %v593 = vpack.c.b16 %v367, %v365
    %v594 = vpack.c.b16 %v370, %v368
    %v595 = vpack.c.b16 %v371, %v369
    %v596 = vpack.c.b16 %v374, %v372
    %v597 = vpack.c.b16 %v375, %v373
    %v598 = vpack.c.b16 %v378, %v376
    %v599 = vpack.c.b16 %v379, %v377
    %v600 = vpack.c.b16 %v382, %v380
    %v601 = vpack.c.b16 %v383, %v381
    %v602 = vpack.c.b16 %v386, %v384
    %v603 = vpack.c.b16 %v387, %v385
    %v604 = vpack.c.b16 %v390, %v388
    %v605 = vpack.c.b16 %v391, %v389
    %v606 = vpack.c.b16 %v394, %v392
    %v607 = vpack.c.b16 %v395, %v393
    %v608 = vpack.c.b16 %v398, %v396
    %v609 = vpack.c.b16 %v399, %v397
    %v610 = vpack.c.b16 %v402, %v400
    %v611 = vpack.c.b16 %v403, %v401
    %v612 = vpack.c.b16 %v406, %v404
    %v613 = vpack.c.b16 %v407, %v405
    %v614 = vpack.c.b16 %v410, %v408
    %v615 = vpack.c.b16 %v411, %v409
    %v616 = vpack.c.b16 %v414, %v412
    %v617 = vpack.c.b16 %v415, %v413
    %v618 = vpack.c.b16 %v418, %v416
    %v619 = vpack.c.b16 %v419, %v417
    %v620 = vpack.c.b16 %v422, %v420
    %v621 = vpack.c.b16 %v423, %v421
    %v622 = vpack.c.b16 %v426, %v424
    %v623 = vpack.c.b16 %v427, %v425
    %v624 = vpack.c.b16 %v430, %v428
    %v625 = vpack.c.b16 %v431, %v429
    %v626 = vpack.c.b16 %v434, %v432
    %v627 = vpack.c.b16 %v435, %v433
    %v628 = vpack.c.b16 %v438, %v436
    %v629 = vpack.c.b16 %v439, %v437
    %v630 = vpack.c.b16 %v442, %v440
    %v631 = vpack.c.b16 %v443, %v441
    %v632 = vpack.c.b16 %v446, %v444
    %v633 = vpack.c.b16 %v447, %v445
    %v634 = vpack.c.b16 %v450, %v448
    %v635 = vpack.c.b16 %v451, %v449
    %v636 = vpack.c.b16 %v454, %v452
    %v637 = vpack.c.b16 %v455, %v453
    %v638 = vpack.c.b16 %v458, %v456
    %v639 = vpack.c.b16 %v459, %v457
    %v640 = vpack.c.b16 %v462, %v460
    %v641 = vpack.c.b16 %v463, %v461
    %v642 = vpack.c.b16 %v466, %v464
    %v643 = vpack.c.b16 %v467, %v465
    %v644 = vpack.c.b16 %v470, %v468
    %v645 = vpack.c.b16 %v471, %v469
    %v646 = vpack.c.b16 %v474, %v472
    %v647 = vpack.c.b16 %v475, %v473
    %v648 = vpack.c.b16 %v478, %v476
    %v649 = vpack.c.b16 %v479, %v477
    %v650 = vpack.c.b16 %v482, %v480
    %v651 = vpack.c.b16 %v483, %v481
    %v652 = vpack.c.b16 %v486, %v484
    %v653 = vpack.c.b16 %v487, %v485
    %v654 = vpack.c.b16 %v490, %v488
    %v655 = vpack.c.b16 %v491, %v489
    %v656 = vpack.c.b16 %v494, %v492
    %v657 = vpack.c.b16 %v495, %v493
    %v658 = vpack.c.b16 %v498, %v496
    %v659 = vpack.c.b16 %v499, %v497
    %v660 = vpack.c.b16 %v502, %v500
    %v661 = vpack.c.b16 %v503, %v501
    %v662 = vpack.c.b16 %v506, %v504
    %v663 = vpack.c.b16 %v507, %v505
    %v664 = vpack.c.b16 %v510, %v508
    %v665 = vpack.c.b16 %v511, %v509
    %v666 = vpack.c.b16 %v514, %v512
    %v667 = vpack.c.b16 %v515, %v513
    %v668 = vpack.c.b16 %v518, %v516
    %v669 = vpack.c.b16 %v519, %v517
    %v670 = vpack.c.b16 %v522, %v520
    %v671 = vpack.c.b16 %v523, %v521
    %v672 = vpack.c.b16 %v526, %v524
    %v673 = vpack.c.b16 %v527, %v525
    %v674 = vpack.c.b16 %v530, %v528
    %v675 = vpack.c.b16 %v531, %v529
    %v676 = vpack.c.b16 %v534, %v532
    %v677 = vpack.c.b16 %v535, %v533
    %v678 = vpack.c.b16 %v538, %v536
    %v679 = vpack.c.b16 %v539, %v537
    %v680 = vpack.c.b16 %v542, %v540
    %v681 = vpack.c.b16 %v543, %v541
    %v682 = vpack.c.b16 %v546, %v544
    %v683 = vpack.c.b16 %v547, %v545
    %v684 = vpack.c.b16 %v550, %v548
    %v685 = vpack.c.b16 %v551, %v549
    %v686 = vpack.c.b16 %v554, %v552
    %v687 = vpack.c.b16 %v555, %v553
    %v688 = vpack.c.b16 %v558, %v556
    %v689 = vpack.c.b16 %v559, %v557
    %v690 = vpack.c.b16 %v562, %v560
    %v691 = vpack.c.b16 %v563, %v561
    %820 = vmatprep.subr.bf16.mxu0 %v565
    %821 = vmatpush1.bf16.xpose.msra.mxu0 %v564
    %822 = vmatprep.subr.bf16.mxu0 %v567
    %823 = vmatpush1.bf16.xpose.msra.mxu0 %v566
    %824 = vmatprep.subr.bf16.mxu0 %v569
    %825 = vmatpush1.bf16.xpose.msra.mxu0 %v568
    %826 = vmatprep.subr.bf16.mxu0 %v571
    %827 = vmatpush1.bf16.xpose.msra.mxu0 %v570
    %828 = vmatprep.subr.bf16.mxu0 %v573
    %829 = vmatpush1.bf16.xpose.msra.mxu0 %v572
    %830 = vmatprep.subr.bf16.mxu0 %v575
    %831 = vmatpush1.bf16.xpose.msra.mxu0 %v574
    %832 = vmatprep.subr.bf16.mxu0 %v577
    %833 = vmatpush1.bf16.xpose.msra.mxu0 %v576
    %834 = vmatprep.subr.bf16.mxu0 %v579
    %835 = vmatpush1.bf16.xpose.msra.mxu0 %v578
    %836 = vmatprep.subr.bf16.mxu0 %v581
    %837 = vmatpush1.bf16.xpose.msra.mxu0 %v580
    %838 = vmatprep.subr.bf16.mxu0 %v583
    %839 = vmatpush1.bf16.xpose.msra.mxu0 %v582
    %840 = vmatprep.subr.bf16.mxu0 %v585
    %841 = vmatpush1.bf16.xpose.msra.mxu0 %v584
    %842 = vmatprep.subr.bf16.mxu0 %v587
    %843 = vmatpush1.bf16.xpose.msra.mxu0 %v586
    %844 = vmatprep.subr.bf16.mxu0 %v589
    %845 = vmatpush1.bf16.xpose.msra.mxu0 %v588
    %846 = vmatprep.subr.bf16.mxu0 %v591
    %847 = vmatpush1.bf16.xpose.msra.mxu0 %v590
    %848 = vmatprep.subr.bf16.mxu0 %v593
    %849 = vmatpush1.bf16.xpose.msra.mxu0 %v592
    %850 = vmatprep.subr.bf16.mxu0 %v595
    %851 = vmatpush1.bf16.xpose.msra.mxu0 %v594
    %852 = vmatprep.mubr.bf16.mxu0 %v177
    %853 = vmatmul.mubr.bf16.gmra.mrb[0].mxu0 %v176
    %v854 = vpop.f32.mrb[0].mxu0
    %v855 = vadd.f32 0.0, %v854
    %v856 = vpop.f32.mrb[0].mxu0
    %v857 = vadd.f32 0.0, %v856
    %v858 = vpop.f32.mrb[0].mxu0
    %v859 = vadd.f32 0.0, %v858
    %v860 = vpop.f32.mrb[0].mxu0
    %v861 = vadd.f32 0.0, %v860
    %862 = vdwg.mxu0
    %863 = vmatprep.subr.bf16.mxu0 %v597
    %864 = vmatpush1.bf16.xpose.msra.mxu0 %v596
    %865 = vmatprep.subr.bf16.mxu0 %v599
    %866 = vmatpush1.bf16.xpose.msra.mxu0 %v598
    %867 = vmatprep.subr.bf16.mxu0 %v601
    %868 = vmatpush1.bf16.xpose.msra.mxu0 %v600
    %869 = vmatprep.subr.bf16.mxu0 %v603
    %870 = vmatpush1.bf16.xpose.msra.mxu0 %v602
    %871 = vmatprep.subr.bf16.mxu0 %v605
    %872 = vmatpush1.bf16.xpose.msra.mxu0 %v604
    %873 = vmatprep.subr.bf16.mxu0 %v607
    %874 = vmatpush1.bf16.xpose.msra.mxu0 %v606
    %875 = vmatprep.subr.bf16.mxu0 %v609
    %876 = vmatpush1.bf16.xpose.msra.mxu0 %v608
    %877 = vmatprep.subr.bf16.mxu0 %v611
    %878 = vmatpush1.bf16.xpose.msra.mxu0 %v610
    %879 = vmatprep.subr.bf16.mxu0 %v613
    %880 = vmatpush1.bf16.xpose.msra.mxu0 %v612
    %881 = vmatprep.subr.bf16.mxu0 %v615
    %882 = vmatpush1.bf16.xpose.msra.mxu0 %v614
    %883 = vmatprep.subr.bf16.mxu0 %v617
    %884 = vmatpush1.bf16.xpose.msra.mxu0 %v616
    %885 = vmatprep.subr.bf16.mxu0 %v619
    %886 = vmatpush1.bf16.xpose.msra.mxu0 %v618
    %887 = vmatprep.subr.bf16.mxu0 %v621
    %888 = vmatpush1.bf16.xpose.msra.mxu0 %v620
    %889 = vmatprep.subr.bf16.mxu0 %v623
    %890 = vmatpush1.bf16.xpose.msra.mxu0 %v622
    %891 = vmatprep.subr.bf16.mxu0 %v625
    %892 = vmatpush1.bf16.xpose.msra.mxu0 %v624
    %893 = vmatprep.subr.bf16.mxu0 %v627
    %894 = vmatpush1.bf16.xpose.msra.mxu0 %v626
    %895 = vmatprep.mubr.bf16.mxu0 %v177
    %896 = vmatmul.mubr.bf16.gmra.mrb[0].mxu0 %v176
    %v897 = vpop.f32.mrb[0].mxu0
    %v898 = vadd.f32 0.0, %v897
    %v899 = vpop.f32.mrb[0].mxu0
    %v900 = vadd.f32 0.0, %v899
    %v901 = vpop.f32.mrb[0].mxu0
    %v902 = vadd.f32 0.0, %v901
    %v903 = vpop.f32.mrb[0].mxu0
    %v904 = vadd.f32 0.0, %v903
    %905 = vdwg.mxu0
    %906 = vmatprep.subr.bf16.mxu0 %v629
    %907 = vmatpush1.bf16.xpose.msra.mxu0 %v628
    %908 = vmatprep.subr.bf16.mxu0 %v631
    %909 = vmatpush1.bf16.xpose.msra.mxu0 %v630
    %910 = vmatprep.subr.bf16.mxu0 %v633
    %911 = vmatpush1.bf16.xpose.msra.mxu0 %v632
    %912 = vmatprep.subr.bf16.mxu0 %v635
    %913 = vmatpush1.bf16.xpose.msra.mxu0 %v634
    %914 = vmatprep.subr.bf16.mxu0 %v637
    %915 = vmatpush1.bf16.xpose.msra.mxu0 %v636
    %916 = vmatprep.subr.bf16.mxu0 %v639
    %917 = vmatpush1.bf16.xpose.msra.mxu0 %v638
    %918 = vmatprep.subr.bf16.mxu0 %v641
    %919 = vmatpush1.bf16.xpose.msra.mxu0 %v640
    %920 = vmatprep.subr.bf16.mxu0 %v643
    %921 = vmatpush1.bf16.xpose.msra.mxu0 %v642
    %922 = vmatprep.subr.bf16.mxu0 %v645
    %923 = vmatpush1.bf16.xpose.msra.mxu0 %v644
    %924 = vmatprep.subr.bf16.mxu0 %v647
    %925 = vmatpush1.bf16.xpose.msra.mxu0 %v646
    %926 = vmatprep.subr.bf16.mxu0 %v649
    %927 = vmatpush1.bf16.xpose.msra.mxu0 %v648
    %928 = vmatprep.subr.bf16.mxu0 %v651
    %929 = vmatpush1.bf16.xpose.msra.mxu0 %v650
    %930 = vmatprep.subr.bf16.mxu0 %v653
    %931 = vmatpush1.bf16.xpose.msra.mxu0 %v652
    %932 = vmatprep.subr.bf16.mxu0 %v655
    %933 = vmatpush1.bf16.xpose.msra.mxu0 %v654
    %934 = vmatprep.subr.bf16.mxu0 %v657
    %935 = vmatpush1.bf16.xpose.msra.mxu0 %v656
    %936 = vmatprep.subr.bf16.mxu0 %v659
    %937 = vmatpush1.bf16.xpose.msra.mxu0 %v658
    %938 = vmatprep.mubr.bf16.mxu0 %v177
    %939 = vmatmul.mubr.bf16.gmra.mrb[0].mxu0 %v176
    %v940 = vpop.f32.mrb[0].mxu0
    %v941 = vadd.f32 0.0, %v940
    %v942 = vpop.f32.mrb[0].mxu0
    %v943 = vadd.f32 0.0, %v942
    %v944 = vpop.f32.mrb[0].mxu0
    %v945 = vadd.f32 0.0, %v944
    %v946 = vpop.f32.mrb[0].mxu0
    %v947 = vadd.f32 0.0, %v946
    %948 = vdwg.mxu0
    %949 = vmatprep.subr.bf16.mxu0 %v661
    %950 = vmatpush1.bf16.xpose.msra.mxu0 %v660
    %951 = vmatprep.subr.bf16.mxu0 %v663
    %952 = vmatpush1.bf16.xpose.msra.mxu0 %v662
    %953 = vmatprep.subr.bf16.mxu0 %v665
    %954 = vmatpush1.bf16.xpose.msra.mxu0 %v664
    %955 = vmatprep.subr.bf16.mxu0 %v667
    %956 = vmatpush1.bf16.xpose.msra.mxu0 %v666
    %957 = vmatprep.subr.bf16.mxu0 %v669
    %958 = vmatpush1.bf16.xpose.msra.mxu0 %v668
    %959 = vmatprep.subr.bf16.mxu0 %v671
    %960 = vmatpush1.bf16.xpose.msra.mxu0 %v670
    %961 = vmatprep.subr.bf16.mxu0 %v673
    %962 = vmatpush1.bf16.xpose.msra.mxu0 %v672
    %963 = vmatprep.subr.bf16.mxu0 %v675
    %964 = vmatpush1.bf16.xpose.msra.mxu0 %v674
    %965 = vmatprep.subr.bf16.mxu0 %v677
    %966 = vmatpush1.bf16.xpose.msra.mxu0 %v676
    %967 = vmatprep.subr.bf16.mxu0 %v679
    %968 = vmatpush1.bf16.xpose.msra.mxu0 %v678
    %969 = vmatprep.subr.bf16.mxu0 %v681
    %970 = vmatpush1.bf16.xpose.msra.mxu0 %v680
    %971 = vmatprep.subr.bf16.mxu0 %v683
    %972 = vmatpush1.bf16.xpose.msra.mxu0 %v682
    %973 = vmatprep.subr.bf16.mxu0 %v685
    %974 = vmatpush1.bf16.xpose.msra.mxu0 %v684
    %975 = vmatprep.subr.bf16.mxu0 %v687
    %976 = vmatpush1.bf16.xpose.msra.mxu0 %v686
    %977 = vmatprep.subr.bf16.mxu0 %v689
    %978 = vmatpush1.bf16.xpose.msra.mxu0 %v688
    %979 = vmatprep.subr.bf16.mxu0 %v691
    %980 = vmatpush1.bf16.xpose.msra.mxu0 %v690
    %981 = vmatprep.mubr.bf16.mxu0 %v177
    %982 = vmatmul.mubr.bf16.gmra.mrb[0].mxu0 %v176
    %v983 = vpop.f32.mrb[0].mxu0
    %v984 = vadd.f32 0.0, %v983
    %v985 = vpop.f32.mrb[0].mxu0
    %v986 = vadd.f32 0.0, %v985
    %v987 = vpop.f32.mrb[0].mxu0
    %v988 = vadd.f32 0.0, %v987
    %v989 = vpop.f32.mrb[0].mxu0
    %v990 = vadd.f32 0.0, %v989
    %991 = vdwg.mxu0
    %992 = vst [vmem:[#allocation7] sm:$0xff] %v855
    %993 = vst [vmem:[#allocation7 + $0x8] sm:$0xff] %v857
    %994 = vst [vmem:[#allocation7 + $0x10] sm:$0xff] %v898
    %995 = vst [vmem:[#allocation7 + $0x18] sm:$0xff] %v900
    %996 = vst [vmem:[#allocation7 + $0x20] sm:$0xff] %v941
    %997 = vst [vmem:[#allocation7 + $0x28] sm:$0xff] %v943
    %998 = vst [vmem:[#allocation7 + $0x30] sm:$0xff] %v984
    %999 = vst [vmem:[#allocation7 + $0x38] sm:$0xff] %v986
    %1000 = vst [vmem:[#allocation7 + $0x40] sm:$0xff] %v859
    %1001 = vst [vmem:[#allocation7 + $0x48] sm:$0xff] %v861
    %1002 = vst [vmem:[#allocation7 + $0x50] sm:$0xff] %v902
    %1003 = vst [vmem:[#allocation7 + $0x58] sm:$0xff] %v904
    %1004 = vst [vmem:[#allocation7 + $0x60] sm:$0xff] %v945
    %1005 = vst [vmem:[#allocation7 + $0x68] sm:$0xff] %v947
    %1006 = vst [vmem:[#allocation7 + $0x70] sm:$0xff] %v988
    %1007 = vst [vmem:[#allocation7 + $0x78] sm:$0xff] %v990
    // Predicated region
    $region18: #{tpu_custom_call.1} parent=1 // pred_check
      _
    $region19: #{tpu_custom_call.1} parent=1 // pred_check_branch
      %1009 = sbr.rel (0) target = $region21
    $region20: #{tpu_custom_call.1} parent=1 // pred_region
      %s1011 = ssub.s32 2048, 2048
      %1012 = vsyncadd [#allocation4], %s1011
      %s1013 = sshll.u32 [#allocation7], 4
      %s1014 = int_to_ptr.vmem [resolvable:$true] %s1013
      %1019 = dma.vmem_to_hbm [thread:$0]  %s1014, 2048, %s2, [#allocation4], 1024, 1024, 64
    $region21: #{tpu_custom_call.1} parent=1 // pred_fallthru
      _
    // Predicated region
    $region22: #{tpu_custom_call.1} parent=1 // pred_check
      _
    $region23: #{tpu_custom_call.1} parent=1 // pred_check_branch
      %1021 = sbr.rel (0) target = $region25
    $region24: #{tpu_custom_call.1} parent=1 // pred_region
      %1022 = dma.done [#allocation4], 2048
    $region25: #{tpu_custom_call.1} parent=1 // pred_fallthru
      _
    %1023 = vsyncpa [#allocation3], 1
    %1024 = vsyncpa [#allocation6], 1
    %1025 = vsyncpa [#allocation4], 1

</llo_original>
